<compile_context>
chip_gen: v5e
topology: v5e:2x2
jax: 0.10.0
libtpu: 0.0.40
codegen_flags: <defaults>
</compile_context>

<pallas_src>
import functools

import jax
import jax.numpy as jnp
from jax.experimental import pallas as pl
from jax.experimental.pallas import tpu as pltpu


def _sequence_mask_kernel(lengths_ref, out_ref):
    # lengths_ref: (tile_b, 1) int32, out_ref: (tile_b, tile_t)
    tile_b, tile_t = out_ref.shape
    j = pl.program_id(1)
    # global column indices for this T-tile, broadcast across the batch tile
    col = j * tile_t + jax.lax.broadcasted_iota(
        jnp.int32, (tile_b, tile_t), dimension=1)
    mask = col < lengths_ref[...]  # (tile_b, tile_t) bool, broadcast over lanes
    out_ref[...] = mask.astype(out_ref.dtype)


def _round_up(x, m):
    return ((x + m - 1) // m) * m


@functools.partial(jax.jit, static_argnames=("max_seq_len", "dtype"))
def _sequence_mask_pallas(lengths, max_seq_len, dtype):
    b = lengths.shape[0]

    # sublane packing of the output dtype: f32 -> 8, bf16 -> 16, int8 -> 32
    itemsize = jnp.dtype(dtype).itemsize
    sublane = max(8, 32 // max(1, itemsize))

    # Lane-dense tiles: T on the fast (lane) axis, large multiple of 128.
    tile_t = min(1024, _round_up(max(1, max_seq_len), 128))
    tile_b = min(512, _round_up(b, sublane))

    # Pad to tile multiples so every grid step writes a full, unmasked tile.
    b_pad = _round_up(b, tile_b)
    t_pad = _round_up(max(1, max_seq_len), tile_t)

    lengths_2d = lengths.astype(jnp.int32).reshape(-1, 1)
    if b_pad != b:
        lengths_2d = jnp.pad(lengths_2d, ((0, b_pad - b), (0, 0)))

    out = pl.pallas_call(
        _sequence_mask_kernel,
        out_shape=jax.ShapeDtypeStruct((b_pad, t_pad), dtype),
        grid_spec=pltpu.PrefetchScalarGridSpec(
            num_scalar_prefetch=0,
            grid=(b_pad // tile_b, t_pad // tile_t),
            in_specs=[pl.BlockSpec((tile_b, 1), lambda i, j: (i, 0))],
            out_specs=pl.BlockSpec((tile_b, tile_t), lambda i, j: (i, j)),
        ),
        compiler_params=pltpu.CompilerParams(
            # every output tile is independent -> shard across TCs on v7x
            dimension_semantics=("parallel", "parallel"),
        ),
    )(lengths_2d)

    # Slice back to the exact requested shape (padding columns/rows dropped).
    return out[:b, :max_seq_len]


def sequence_mask(lengths, max_seq_len=None, dtype=jnp.float32):
    """JAX/Pallas equivalent of the PyTorch sequence_mask module's forward."""
    lengths = jnp.asarray(lengths)
    if max_seq_len is None:
        # Shape must be static: pull max to host (mirrors lengths.max() in
        # torch). Avoid this path in hot loops: it forces a device->host sync
        # and each distinct value triggers a recompile of the jitted call.
        max_seq_len = int(jax.device_get(lengths.max()))
    return _sequence_mask_pallas(lengths, int(max_seq_len), dtype)


if __name__ == "__main__":
    key = jax.random.PRNGKey(0)
    batch = 8
    max_len = 16
    lengths = jax.random.randint(key, (batch,), minval=1, maxval=max_len + 1,
                                 dtype=jnp.int32)

    mask = sequence_mask(lengths, max_seq_len=max_len, dtype=jnp.float32)
    mask = jax.block_until_ready(mask)

    # reference check in plain JAX
    ref = (jnp.arange(max_len)[None, :] < lengths[:, None]).astype(jnp.float32)
    assert mask.shape == (batch, max_len)
    assert mask.dtype == jnp.float32
    assert bool(jnp.all(mask == ref))

    # also exercise the max_seq_len=None path (lengths.max())
    mask2 = jax.block_until_ready(sequence_mask(lengths, dtype=jnp.float32))
    ref2 = (jnp.arange(int(lengths.max()))[None, :] < lengths[:, None]).astype(
        jnp.float32)
    assert bool(jnp.all(mask2 == ref2))

    # narrower dtype path (bf16) exercises the sublane-packing tile rule
    mask3 = jax.block_until_ready(
        sequence_mask(lengths, max_seq_len=max_len, dtype=jnp.bfloat16))
    assert mask3.dtype == jnp.bfloat16
    assert bool(jnp.all(mask3.astype(jnp.float32) == ref))

    # exercise a T > TILE_T, unaligned shape to hit the multi-tile / padded path
    long_len = 1536 + 7
    mask4 = jax.block_until_ready(
        sequence_mask(lengths * 100, max_seq_len=long_len, dtype=jnp.float32))
    ref4 = (jnp.arange(long_len)[None, :] < (lengths * 100)[:, None]).astype(
        jnp.float32)
    assert mask4.shape == (batch, long_len)
    assert bool(jnp.all(mask4 == ref4))

    print("KERNEL_OK")
</pallas_src>

<mosaic_0001>
module attributes {stable_mosaic.version = 11 : i64} {
  func.func @_sequence_mask_kernel(%arg0: i32, %arg1: i32, %arg2: memref<8x1xi32, #tpu.memory_space<vmem>>, %arg3: memref<8x128xf32, #tpu.memory_space<vmem>>) attributes {dimension_semantics = [#tpu.dimension_semantics<parallel>, #tpu.dimension_semantics<parallel>], iteration_bounds = array<i64: 1, 1>, scalar_prefetch = 0 : i64, scratch_operands = 0 : i64, tpu.core_type = #tpu.core_type<tc>, window_params = [{transform_indices = @transform_0, window_bounds = array<i64: 8, 1>}, {transform_indices = @transform_1, window_bounds = array<i64: 8, 128>}]} {
    %c128_i32 = arith.constant 128 : i32
    %0 = arith.muli %arg1, %c128_i32 : i32
    %1 = tpu.iota {dimensions = array<i32: 1>} : vector<8x128xi32>
    %2 = vector.broadcast %0 : i32 to vector<8x128xi32>
    %3 = arith.addi %2, %1 : vector<8x128xi32>
    %c0 = arith.constant 0 : index
    %c0_0 = arith.constant 0 : index
    %4 = vector.load %arg2[%c0, %c0_0] : memref<8x1xi32, #tpu.memory_space<vmem>>, vector<8x1xi32>
    %5 = vector.broadcast %4 : vector<8x1xi32> to vector<8x128xi32>
    %6 = arith.cmpi slt, %3, %5 : vector<8x128xi32>
    %7 = arith.extui %6 : vector<8x128xi1> to vector<8x128xi32>
    %8 = arith.sitofp %7 : vector<8x128xi32> to vector<8x128xf32>
    %c0_1 = arith.constant 0 : index
    %c0_2 = arith.constant 0 : index
    %9 = vector.load %arg3[%c0_1, %c0_2] : memref<8x128xf32, #tpu.memory_space<vmem>>, vector<8x128xf32>
    tpu.vector_store %arg3[%c0_1, %c0_2], %8 {strides = array<i32>} : memref<8x128xf32, #tpu.memory_space<vmem>>, vector<8x128xf32>,
    return
  }
  func.func @transform_0(%arg0: i32, %arg1: i32) -> (i32, i32) {
    %c0_i32 = arith.constant 0 : i32
    %c0_i32_0 = arith.constant 0 : i32
    return %arg0, %c0_i32 : i32, i32
  }
  func.func @transform_1(%arg0: i32, %arg1: i32) -> (i32, i32) {
    %c0_i32 = arith.constant 0 : i32
    return %arg0, %arg1 : i32, i32
  }
}

</mosaic_0001>

<llo_original>
// kernel: _sequence_mask_pallas.1
$region0: #{_sequence_mask_pallas.1}
  #allocation0 [shape = 'u32[]', space=smem, size = 0x4, offset = 0x4, fixed_abs, tag = 'smem constant byte address 0x4 - core index']
  #allocation1 [shape = 'u32[72,128]{1,0:T(1,128)}', space=vmem, size = 0x9000, scoped, tag = 'internal scratch']
  %s0 = inlined_call_operand.vmem [shape: s32[8,1], index: 0, kind: input, shape index: {}]
  %s1 = inlined_call_operand.hbm [shape: f32[8,128], index: 1, kind: output, shape index: {}]
  %s2 = sld [smem:[#allocation0]]
  $region14: #{_sequence_mask_pallas.1} parent=0
    _
  %s4 = ssub.s32 1, %s2
  %s5 = scalar_select 0, %s4, %s2
  $region1: #{_sequence_mask_pallas.1} parent=0
    #allocation2 [shape = 'u8[4096]{0}', space=vmem, size = 0x1000, scoped, tag = 'output window, operand 0, single buffered']
    #allocation3 [shape = 's32[1]{0}', space=sflag, size = 0x4, scoped, tag = 'scoped memory for _sequence_mask_pallas.1']
    %6 = vsyncpa [#allocation3], 0
    // Predicated region
    $region2: #{_sequence_mask_pallas.1} parent=1 // pred_check
      _
    $region3: #{_sequence_mask_pallas.1} parent=1 // pred_check_branch
      %8 = sbr.rel (0) target = $region5
    $region4: #{_sequence_mask_pallas.1} parent=1 // pred_region
      _
    $region5: #{_sequence_mask_pallas.1} parent=1 // pred_fallthru
      _
    %s9 = smul.u32 0, 128
    %v10 = vlaneseq
    %v11 = vand.u32 %v10, 127
    %v12 = vstv %s9
    %v13 = vadd.s32 %v12, %v11
    %v14 = vld [vmem:[%s0] sm:$0xff]
    %15 = vset.pattern.permute.xlu0 0
    %16 = vperm.xlu0 %15, %v14
    %v17 = vpop.permute.xlu0 %16
    %vm18 = vcmp.lt.s32.totalorder %v13, %v17
    %v19 = vsel %vm18, 1, 0
    %v20 = vcvt.s32.f32 %v19
    %21 = vst [vmem:[#allocation2] sm:$0xff] %v20
    // Predicated region
    $region6: #{_sequence_mask_pallas.1} parent=1 // pred_check
      _
    $region7: #{_sequence_mask_pallas.1} parent=1 // pred_check_branch
      %23 = sbr.rel (0) target = $region9
    $region8: #{_sequence_mask_pallas.1} parent=1 // pred_region
      %25 = vsyncadd [#allocation3], 0
      %s27 = sshll.u32 [#allocation2], 4
      %s28 = int_to_ptr.vmem [resolvable:$true] %s27
      %s29 = sshll.u32 %s1, 4
      %s30 = int_to_ptr.hbm [resolvable:$true] %s29
      %32 = dma.vmem_to_hbm [thread:$0]  %s28, 128, %s30, [#allocation3]
    $region9: #{_sequence_mask_pallas.1} parent=1 // pred_fallthru
      _
    // Predicated region
    $region10: #{_sequence_mask_pallas.1} parent=1 // pred_check
      _
    $region11: #{_sequence_mask_pallas.1} parent=1 // pred_check_branch
      %34 = sbr.rel (0) target = $region13
    $region12: #{_sequence_mask_pallas.1} parent=1 // pred_region
      %36 = dma.done [#allocation3], 128
    $region13: #{_sequence_mask_pallas.1} parent=1 // pred_fallthru
      _
    %37 = vsyncpa [#allocation3], 1

</llo_original>
